<compile_context>
chip_gen: v6e
topology: v6e:2x2x1
jax: 0.10.0
libtpu: 0.0.40
codegen_flags: <defaults>
</compile_context>

<pallas_src>
import functools

import jax
import jax.numpy as jnp
from jax.experimental import pallas as pl
from jax.experimental.pallas import tpu as pltpu


def _round_up(a: int, b: int) -> int:
    return ((a + b - 1) // b) * b


def _node_model_kernel(col_ref, ea_ref, xg_ref,
                       w1xg_ref, w1e_ref, b1_ref,
                       w2_ref, b2_ref, w3_ref, b3_ref,
                       out_ref, msg_acc):
    ni = pl.program_id(0)          # node-tile index   ("parallel")
    ei = pl.program_id(1)          # edge-tile index   ("arbitrary", reduction)

    @pl.when(ei == 0)
    def _init():
        msg_acc[...] = jnp.zeros_like(msg_acc)

    # --- scatter_add(edge_attr, col) restricted to this (node, edge) tile -----
    tn = msg_acc.shape[0]
    te = ea_ref.shape[0]
    node_base = ni * tn
    col = col_ref[...]                                               # (1, TE) i32
    node_ids = node_base + jax.lax.broadcasted_iota(jnp.int32, (tn, te), 0)
    onehot = (node_ids == col).astype(ea_ref.dtype)                  # exact 0/1
    msg_acc[...] += jnp.dot(onehot, ea_ref[...],
                            preferred_element_type=jnp.float32)      # (TN, De) f32

    # --- MLP once every edge tile has been accumulated ------------------------
    @pl.when(ei == pl.num_programs(1) - 1)
    def _mlp():
        w_dtype = w1xg_ref.dtype
        # first Linear: concat([x, msg, u[batch]]) @ W1  ==  [x|ug]@W1xg + msg@W1e
        h = jnp.dot(xg_ref[...], w1xg_ref[...],
                    preferred_element_type=jnp.float32)
        h = h + jnp.dot(msg_acc[...].astype(w_dtype), w1e_ref[...],
                        preferred_element_type=jnp.float32)
        h = jnp.maximum(h + b1_ref[...], 0.0)                        # f32 VPU

        h = jnp.dot(h.astype(w_dtype), w2_ref[...],
                    preferred_element_type=jnp.float32) + b2_ref[...]
        h = jnp.maximum(h, 0.0)                                      # f32 VPU

        out_ref[...] = (jnp.dot(h.astype(w_dtype), w3_ref[...],
                                preferred_element_type=jnp.float32)
                        + b3_ref[...])


def node_model_forward(params, x, edge_index, edge_attr, u, batch,
                       *, tile_n=256, tile_e=512, use_bf16_mxu=True):
    """Pallas-backed NodeModel.forward (eval mode).  Weights stored as [in, out]."""
    w1, b1, w2, b2, w3, b3 = params
    N, Dn = x.shape
    E, De = edge_attr.shape
    Dg = u.shape[1]
    H = w1.shape[1]
    Do = w3.shape[1]
    Dxg = Dn + Dg

    mxu_dtype = jnp.bfloat16 if use_bf16_mxu else jnp.float32

    # ---- lane-dense padding for hidden / output feature dims -----------------
    H_pad = _round_up(H, 128)
    Do_pad = _round_up(Do, 128)

    # ---- tile sizes & row padding --------------------------------------------
    TN = _round_up(min(tile_n, _round_up(N, 8)), 8)
    N_pad = _round_up(N, TN)
    TE = _round_up(min(tile_e, _round_up(E, 128)), 128)
    E_pad = _round_up(E, TE)
    grid = (N_pad // TN, E_pad // TE)

    # ---- node-side features: pre-concat [x | u[batch]] outside the kernel ----
    ug = u[batch]                                                     # gather glue
    xg = jnp.concatenate([x, ug], axis=-1).astype(mxu_dtype)          # (N, Dxg)
    xg = jnp.pad(xg, ((0, N_pad - N), (0, 0)))

    # ---- edges (padded cols use -1 so they never match a node id) ------------
    col = edge_index[1].astype(jnp.int32)
    col = jnp.pad(col, (0, E_pad - E), constant_values=-1).reshape(1, E_pad)
    ea = jnp.pad(edge_attr.astype(mxu_dtype), ((0, E_pad - E), (0, 0)))

    # ---- merged + zero-padded weights (concat order is [x, msg, u[batch]]) ---
    def pad2(a, r, c):
        return jnp.pad(a, ((0, r - a.shape[0]), (0, c - a.shape[1])))

    w1x, w1e_w, w1g = w1[:Dn], w1[Dn:Dn + De], w1[Dn + De:]
    w1xg_p = pad2(jnp.concatenate([w1x, w1g], axis=0), Dxg, H_pad).astype(mxu_dtype)
    w1e_p = pad2(w1e_w, De, H_pad).astype(mxu_dtype)
    b1_p = jnp.pad(b1, (0, H_pad - H)).reshape(1, H_pad).astype(jnp.float32)
    w2_p = pad2(w2, H_pad, H_pad).astype(mxu_dtype)
    b2_p = jnp.pad(b2, (0, H_pad - H)).reshape(1, H_pad).astype(jnp.float32)
    w3_p = pad2(w3, H_pad, Do_pad).astype(mxu_dtype)
    b3_p = jnp.pad(b3, (0, Do_pad - Do)).reshape(1, Do_pad).astype(jnp.float32)

    args = (col, ea, xg, w1xg_p, w1e_p, b1_p, w2_p, b2_p, w3_p, b3_p)

    in_specs = [
        pl.BlockSpec((1, TE), lambda ni, ei: (0, ei)),          # col
        pl.BlockSpec((TE, De), lambda ni, ei: (ei, 0)),         # edge_attr
        pl.BlockSpec((TN, Dxg), lambda ni, ei: (ni, 0)),        # [x | u[batch]]
        pl.BlockSpec((Dxg, H_pad), lambda ni, ei: (0, 0)),      # W1xg
        pl.BlockSpec((De, H_pad), lambda ni, ei: (0, 0)),       # W1e
        pl.BlockSpec((1, H_pad), lambda ni, ei: (0, 0)),        # b1
        pl.BlockSpec((H_pad, H_pad), lambda ni, ei: (0, 0)),    # W2
        pl.BlockSpec((1, H_pad), lambda ni, ei: (0, 0)),        # b2
        pl.BlockSpec((H_pad, Do_pad), lambda ni, ei: (0, 0)),   # W3
        pl.BlockSpec((1, Do_pad), lambda ni, ei: (0, 0)),       # b3
    ]
    out_specs = pl.BlockSpec((TN, Do_pad), lambda ni, ei: (ni, 0))

    flops = int(2 * N_pad * E_pad * De                      # one-hot scatter matmul
                + 2 * N_pad * (Dxg + De) * H_pad            # first Linear
                + 2 * N_pad * H_pad * H_pad                 # second Linear
                + 2 * N_pad * H_pad * Do_pad)               # third Linear
    bytes_accessed = int(sum(a.size * a.dtype.itemsize for a in args)
                         + N_pad * Do_pad * 4)
    cost = pl.CostEstimate(flops=flops, transcendentals=0,
                           bytes_accessed=bytes_accessed)

    out_padded = pl.pallas_call(
        _node_model_kernel,
        out_shape=jax.ShapeDtypeStruct((N_pad, Do_pad), jnp.float32),
        grid_spec=pltpu.PrefetchScalarGridSpec(
            num_scalar_prefetch=0,
            grid=grid,
            in_specs=in_specs,
            out_specs=out_specs,
            scratch_shapes=[pltpu.VMEM((TN, De), jnp.float32)],   # msg accumulator
        ),
        compiler_params=pltpu.CompilerParams(
            dimension_semantics=("parallel", "arbitrary"),
            vmem_limit_bytes=32 * 1024 * 1024,
        ),
        cost_estimate=cost,
    )(*args)

    return out_padded[:N, :Do]


def init_mlp_params(key, input_size, hidden_size, output_size):
    """nn.Linear-style init (uniform +/- 1/sqrt(fan_in)); weights stored [in, out]."""
    def linear(kw, kb, fan_in, fan_out):
        bound = 1.0 / jnp.sqrt(jnp.float32(fan_in))
        w = jax.random.uniform(kw, (fan_in, fan_out), jnp.float32, -bound, bound)
        b = jax.random.uniform(kb, (fan_out,), jnp.float32, -bound, bound)
        return w, b

    k = jax.random.split(key, 6)
    w1, b1 = linear(k[0], k[1], input_size, hidden_size)
    w2, b2 = linear(k[2], k[3], hidden_size, hidden_size)
    w3, b3 = linear(k[4], k[5], hidden_size, output_size)
    return (w1, b1, w2, b2, w3, b3)


def reference_forward(params, x, edge_index, edge_attr, u, batch):
    """Pure-JAX f32 reference replicating the PyTorch forward exactly."""
    w1, b1, w2, b2, w3, b3 = params
    N = x.shape[0]
    col = edge_index[1]
    received = jnp.zeros((N, edge_attr.shape[1]), jnp.float32).at[col].add(edge_attr)
    out = jnp.concatenate([x, received, u[batch]], axis=-1)
    h = jax.nn.relu(out @ w1 + b1)
    h = jax.nn.relu(h @ w2 + b2)
    return h @ w3 + b3


if __name__ == "__main__":
    # Small deterministic problem (big enough to exercise the 2-D grid).
    node_input_size = 12
    edge_input_size = 8
    global_input_size = 4
    hidden_size = 32
    node_output_size = 16
    N, E, B = 48, 300, 4

    key = jax.random.PRNGKey(0)
    k_x, k_ea, k_u, k_ei, k_p = jax.random.split(key, 5)

    x = jax.random.normal(k_x, (N, node_input_size), jnp.float32)
    edge_attr = jax.random.normal(k_ea, (E, edge_input_size), jnp.float32)
    u = jax.random.normal(k_u, (B, global_input_size), jnp.float32)
    edge_index = jax.random.randint(k_ei, (2, E), 0, N, jnp.int32)
    batch = jnp.repeat(jnp.arange(B, dtype=jnp.int32), N // B)

    mlp_input_size = node_input_size + edge_input_size + global_input_size
    params = init_mlp_params(k_p, mlp_input_size, hidden_size, node_output_size)

    y_ref = reference_forward(params, x, edge_index, edge_attr, u, batch)

    # f32 MXU path: bit-level-close to the reference.
    y_f32 = node_model_forward(params, x, edge_index, edge_attr, u, batch,
                               tile_n=32, tile_e=128, use_bf16_mxu=False)
    y_f32 = jax.block_until_ready(y_f32)
    assert y_f32.shape == (N, node_output_size)
    assert jnp.allclose(y_f32, y_ref, atol=1e-4, rtol=1e-4), \
        "Pallas kernel (f32) mismatch vs reference"

    # bf16-on-MXU path (default, faster): f32 accumulation, looser tolerance.
    y_bf16 = node_model_forward(params, x, edge_index, edge_attr, u, batch,
                                tile_n=32, tile_e=128, use_bf16_mxu=True)
    y_bf16 = jax.block_until_ready(y_bf16)
    assert y_bf16.shape == (N, node_output_size)
    assert jnp.allclose(y_bf16, y_ref, atol=5e-2, rtol=5e-2), \
        "Pallas kernel (bf16 MXU) mismatch vs reference"

    print("KERNEL_OK")
</pallas_src>

<mosaic_0001>
module attributes {stable_mosaic.version = 11 : i64} {
  func.func @_node_model_kernel(%arg0: i32, %arg1: i32, %arg2: memref<1x128xi32, #tpu.memory_space<vmem>>, %arg3: memref<128x8xf32, #tpu.memory_space<vmem>>, %arg4: memref<32x16xf32, #tpu.memory_space<vmem>>, %arg5: memref<16x128xf32, #tpu.memory_space<vmem>>, %arg6: memref<8x128xf32, #tpu.memory_space<vmem>>, %arg7: memref<1x128xf32, #tpu.memory_space<vmem>>, %arg8: memref<128x128xf32, #tpu.memory_space<vmem>>, %arg9: memref<1x128xf32, #tpu.memory_space<vmem>>, %arg10: memref<128x128xf32, #tpu.memory_space<vmem>>, %arg11: memref<1x128xf32, #tpu.memory_space<vmem>>, %arg12: memref<32x128xf32, #tpu.memory_space<vmem>>, %arg13: memref<32x8xf32, #tpu.memory_space<vmem>>) attributes {dimension_semantics = [#tpu.dimension_semantics<parallel>, #tpu.dimension_semantics<arbitrary>], iteration_bounds = array<i64: 2, 3>, scalar_prefetch = 0 : i64, scratch_operands = 1 : i64, tpu.core_type = #tpu.core_type<tc>, window_params = [{transform_indices = @transform_0, window_bounds = array<i64: 1, 128>}, {transform_indices = @transform_1, window_bounds = array<i64: 128, 8>}, {transform_indices = @transform_2, window_bounds = array<i64: 32, 16>}, {pipeline_mode = #tpu.pipeline_mode<synchronous>, transform_indices = @transform_3, window_bounds = array<i64: 16, 128>}, {pipeline_mode = #tpu.pipeline_mode<synchronous>, transform_indices = @transform_4, window_bounds = array<i64: 8, 128>}, {pipeline_mode = #tpu.pipeline_mode<synchronous>, transform_indices = @transform_5, window_bounds = array<i64: 1, 128>}, {pipeline_mode = #tpu.pipeline_mode<synchronous>, transform_indices = @transform_6, window_bounds = array<i64: 128, 128>}, {pipeline_mode = #tpu.pipeline_mode<synchronous>, transform_indices = @transform_7, window_bounds = array<i64: 1, 128>}, {pipeline_mode = #tpu.pipeline_mode<synchronous>, transform_indices = @transform_8, window_bounds = array<i64: 128, 128>}, {pipeline_mode = #tpu.pipeline_mode<synchronous>, transform_indices = @transform_9, window_bounds = array<i64: 1, 128>}, {transform_indices = @transform_10, window_bounds = array<i64: 32, 128>}]} {
    %c0_i32 = arith.constant 0 : i32
    %0 = arith.cmpi eq, %arg1, %c0_i32 : i32
    %1 = arith.extui %0 : i1 to i32
    %c0_i32_0 = arith.constant 0 : i32
    %2 = arith.cmpi ne, %1, %c0_i32_0 : i32
    scf.if %2 {
      %cst_9 = arith.constant 0.000000e+00 : f32
      %20 = vector.broadcast %cst_9 : f32 to vector<32x8xf32>
      %c0_10 = arith.constant 0 : index
      %c0_11 = arith.constant 0 : index
      %21 = vector.load %arg13[%c0_10, %c0_11] : memref<32x8xf32, #tpu.memory_space<vmem>>, vector<32x8xf32>
      tpu.vector_store %arg13[%c0_10, %c0_11], %20 {strides = array<i32>} : memref<32x8xf32, #tpu.memory_space<vmem>>, vector<32x8xf32>,
    } else {
    }
    %c32_i32 = arith.constant 32 : i32
    %3 = arith.muli %arg0, %c32_i32 : i32
    %c0 = arith.constant 0 : index
    %c0_1 = arith.constant 0 : index
    %4 = vector.load %arg2[%c0, %c0_1] : memref<1x128xi32, #tpu.memory_space<vmem>>, vector<1x128xi32>
    %5 = tpu.iota {dimensions = array<i32: 0>} : vector<32x128xi32>
    %6 = vector.broadcast %3 : i32 to vector<32x128xi32>
    %7 = arith.addi %6, %5 : vector<32x128xi32>
    %8 = vector.broadcast %4 : vector<1x128xi32> to vector<32x128xi32>
    %9 = arith.cmpi eq, %7, %8 : vector<32x128xi32>
    %10 = arith.extui %9 : vector<32x128xi1> to vector<32x128xi32>
    %11 = arith.sitofp %10 : vector<32x128xi32> to vector<32x128xf32>
    %c0_2 = arith.constant 0 : index
    %c0_3 = arith.constant 0 : index
    %12 = vector.load %arg13[%c0_2, %c0_3] : memref<32x8xf32, #tpu.memory_space<vmem>>, vector<32x8xf32>
    %c0_4 = arith.constant 0 : index
    %c0_5 = arith.constant 0 : index
    %13 = vector.load %arg3[%c0_4, %c0_5] : memref<128x8xf32, #tpu.memory_space<vmem>>, vector<128x8xf32>
    %cst = arith.constant dense<0.000000e+00> : vector<32x8xf32>
    %14 = tpu.matmul %11, %13, %cst {dimension_numbers = #tpu.dot_dimension_numbers<[1], [0], [0], [1], [0, 0, 1, 1], [], []>} : vector<32x128xf32>, vector<128x8xf32>, vector<32x8xf32> -> vector<32x8xf32>
    %15 = arith.addf %12, %14 : vector<32x8xf32>
    %c0_6 = arith.constant 0 : index
    %c0_7 = arith.constant 0 : index
    %16 = vector.load %arg13[%c0_6, %c0_7] : memref<32x8xf32, #tpu.memory_space<vmem>>, vector<32x8xf32>
    tpu.vector_store %arg13[%c0_6, %c0_7], %15 {strides = array<i32>} : memref<32x8xf32, #tpu.memory_space<vmem>>, vector<32x8xf32>,
    %c2_i32 = arith.constant 2 : i32
    %17 = arith.cmpi eq, %arg1, %c2_i32 : i32
    %18 = arith.extui %17 : i1 to i32
    %c0_i32_8 = arith.constant 0 : i32
    %19 = arith.cmpi ne, %18, %c0_i32_8 : i32
    scf.if %19 {
      %c0_9 = arith.constant 0 : index
      %c0_10 = arith.constant 0 : index
      %20 = vector.load %arg4[%c0_9, %c0_10] : memref<32x16xf32, #tpu.memory_space<vmem>>, vector<32x16xf32>
      %c0_11 = arith.constant 0 : index
      %c0_12 = arith.constant 0 : index
      %21 = vector.load %arg5[%c0_11, %c0_12] : memref<16x128xf32, #tpu.memory_space<vmem>>, vector<16x128xf32>
      %cst_13 = arith.constant dense<0.000000e+00> : vector<32x128xf32>
      %22 = tpu.matmul %20, %21, %cst_13 {dimension_numbers = #tpu.dot_dimension_numbers<[1], [0], [0], [1], [0, 0, 1, 1], [], []>} : vector<32x16xf32>, vector<16x128xf32>, vector<32x128xf32> -> vector<32x128xf32>
      %c0_14 = arith.constant 0 : index
      %c0_15 = arith.constant 0 : index
      %23 = vector.load %arg13[%c0_14, %c0_15] : memref<32x8xf32, #tpu.memory_space<vmem>>, vector<32x8xf32>
      %c0_16 = arith.constant 0 : index
      %c0_17 = arith.constant 0 : index
      %24 = vector.load %arg6[%c0_16, %c0_17] : memref<8x128xf32, #tpu.memory_space<vmem>>, vector<8x128xf32>
      %cst_18 = arith.constant dense<0.000000e+00> : vector<32x128xf32>
      %25 = tpu.matmul %23, %24, %cst_18 {dimension_numbers = #tpu.dot_dimension_numbers<[1], [0], [0], [1], [0, 0, 1, 1], [], []>} : vector<32x8xf32>, vector<8x128xf32>, vector<32x128xf32> -> vector<32x128xf32>
      %26 = arith.addf %22, %25 : vector<32x128xf32>
      %c0_19 = arith.constant 0 : index
      %c0_20 = arith.constant 0 : index
      %27 = vector.load %arg7[%c0_19, %c0_20] : memref<1x128xf32, #tpu.memory_space<vmem>>, vector<1x128xf32>
      %28 = vector.broadcast %27 : vector<1x128xf32> to vector<32x128xf32>
      %29 = arith.addf %26, %28 : vector<32x128xf32>
      %cst_21 = arith.constant 0.000000e+00 : f32
      %30 = vector.broadcast %cst_21 : f32 to vector<32x128xf32>
      %31 = arith.maximumf %29, %30 : vector<32x128xf32>
      %c0_22 = arith.constant 0 : index
      %c0_23 = arith.constant 0 : index
      %32 = vector.load %arg8[%c0_22, %c0_23] : memref<128x128xf32, #tpu.memory_space<vmem>>, vector<128x128xf32>
      %cst_24 = arith.constant dense<0.000000e+00> : vector<32x128xf32>
      %33 = tpu.matmul %31, %32, %cst_24 {dimension_numbers = #tpu.dot_dimension_numbers<[1], [0], [0], [1], [0, 0, 1, 1], [], []>} : vector<32x128xf32>, vector<128x128xf32>, vector<32x128xf32> -> vector<32x128xf32>
      %c0_25 = arith.constant 0 : index
      %c0_26 = arith.constant 0 : index
      %34 = vector.load %arg9[%c0_25, %c0_26] : memref<1x128xf32, #tpu.memory_space<vmem>>, vector<1x128xf32>
      %35 = vector.broadcast %34 : vector<1x128xf32> to vector<32x128xf32>
      %36 = arith.addf %33, %35 : vector<32x128xf32>
      %cst_27 = arith.constant 0.000000e+00 : f32
      %37 = vector.broadcast %cst_27 : f32 to vector<32x128xf32>
      %38 = arith.maximumf %36, %37 : vector<32x128xf32>
      %c0_28 = arith.constant 0 : index
      %c0_29 = arith.constant 0 : index
      %39 = vector.load %arg10[%c0_28, %c0_29] : memref<128x128xf32, #tpu.memory_space<vmem>>, vector<128x128xf32>
      %cst_30 = arith.constant dense<0.000000e+00> : vector<32x128xf32>
      %40 = tpu.matmul %38, %39, %cst_30 {dimension_numbers = #tpu.dot_dimension_numbers<[1], [0], [0], [1], [0, 0, 1, 1], [], []>} : vector<32x128xf32>, vector<128x128xf32>, vector<32x128xf32> -> vector<32x128xf32>
      %c0_31 = arith.constant 0 : index
      %c0_32 = arith.constant 0 : index
      %41 = vector.load %arg11[%c0_31, %c0_32] : memref<1x128xf32, #tpu.memory_space<vmem>>, vector<1x128xf32>
      %42 = vector.broadcast %41 : vector<1x128xf32> to vector<32x128xf32>
      %43 = arith.addf %40, %42 : vector<32x128xf32>
      %c0_33 = arith.constant 0 : index
      %c0_34 = arith.constant 0 : index
      %44 = vector.load %arg12[%c0_33, %c0_34] : memref<32x128xf32, #tpu.memory_space<vmem>>, vector<32x128xf32>
      tpu.vector_store %arg12[%c0_33, %c0_34], %43 {strides = array<i32>} : memref<32x128xf32, #tpu.memory_space<vmem>>, vector<32x128xf32>,
    } else {
    }
    return
  }
  func.func @transform_0(%arg0: i32, %arg1: i32) -> (i32, i32) {
    %c0_i32 = arith.constant 0 : i32
    %c0_i32_0 = arith.constant 0 : i32
    return %c0_i32, %arg1 : i32, i32
  }
  func.func @transform_1(%arg0: i32, %arg1: i32) -> (i32, i32) {
    %c0_i32 = arith.constant 0 : i32
    %c0_i32_0 = arith.constant 0 : i32
    return %arg1, %c0_i32 : i32, i32
  }
  func.func @transform_2(%arg0: i32, %arg1: i32) -> (i32, i32) {
    %c0_i32 = arith.constant 0 : i32
    %c0_i32_0 = arith.constant 0 : i32
    return %arg0, %c0_i32 : i32, i32
  }
  func.func @transform_3(%arg0: i32, %arg1: i32) -> (i32, i32) {
    %c0_i32 = arith.constant 0 : i32
    %c0_i32_0 = arith.constant 0 : i32
    %c0_i32_1 = arith.constant 0 : i32
    return %c0_i32, %c0_i32_0 : i32, i32
  }
  func.func @transform_4(%arg0: i32, %arg1: i32) -> (i32, i32) {
    %c0_i32 = arith.constant 0 : i32
    %c0_i32_0 = arith.constant 0 : i32
    %c0_i32_1 = arith.constant 0 : i32
    return %c0_i32, %c0_i32_0 : i32, i32
  }
  func.func @transform_5(%arg0: i32, %arg1: i32) -> (i32, i32) {
    %c0_i32 = arith.constant 0 : i32
    %c0_i32_0 = arith.constant 0 : i32
    %c0_i32_1 = arith.constant 0 : i32
    return %c0_i32, %c0_i32_0 : i32, i32
  }
  func.func @transform_6(%arg0: i32, %arg1: i32) -> (i32, i32) {
    %c0_i32 = arith.constant 0 : i32
    %c0_i32_0 = arith.constant 0 : i32
    %c0_i32_1 = arith.constant 0 : i32
    return %c0_i32, %c0_i32_0 : i32, i32
  }
  func.func @transform_7(%arg0: i32, %arg1: i32) -> (i32, i32) {
    %c0_i32 = arith.constant 0 : i32
    %c0_i32_0 = arith.constant 0 : i32
    %c0_i32_1 = arith.constant 0 : i32
    return %c0_i32, %c0_i32_0 : i32, i32
  }
  func.func @transform_8(%arg0: i32, %arg1: i32) -> (i32, i32) {
    %c0_i32 = arith.constant 0 : i32
    %c0_i32_0 = arith.constant 0 : i32
    %c0_i32_1 = arith.constant 0 : i32
    return %c0_i32, %c0_i32_0 : i32, i32
  }
  func.func @transform_9(%arg0: i32, %arg1: i32) -> (i32, i32) {
    %c0_i32 = arith.constant 0 : i32
    %c0_i32_0 = arith.constant 0 : i32
    %c0_i32_1 = arith.constant 0 : i32
    return %c0_i32, %c0_i32_0 : i32, i32
  }
  func.func @transform_10(%arg0: i32, %arg1: i32) -> (i32, i32) {
    %c0_i32 = arith.constant 0 : i32
    %c0_i32_0 = arith.constant 0 : i32
    return %arg0, %c0_i32 : i32, i32
  }
}

</mosaic_0001>

<llo_original>
// kernel: tpu_custom_call.1
$region0: #{tpu_custom_call.1}
  #allocation0 [shape = 'u32[]', space=smem, size = 0x4, offset = 0x4, fixed_abs, tag = 'smem constant byte address 0x4 - core index']
  #allocation1 [shape = 'u32[144,128]{1,0:T(1,128)}', space=vmem, size = 0x12000, scoped, tag = 'internal scratch']
  #allocation2 [shape = 'f32[32,8]{1,0:T(8,128)}', space=vmem, size = 0x4000, scoped, tag = 'scratch operand']
  %s0 = inlined_call_operand.vmem [shape: s32[1,384], index: 0, kind: input, shape index: {}]
  %s1 = inlined_call_operand.vmem [shape: f32[384,8], index: 1, kind: input, shape index: {}]
  %s2 = inlined_call_operand.vmem [shape: f32[64,16], index: 2, kind: input, shape index: {}]
  %s3 = inlined_call_operand.vmem [shape: f32[16,128], index: 3, kind: input, shape index: {}]
  %s4 = inlined_call_operand.vmem [shape: f32[8,128], index: 4, kind: input, shape index: {}]
  %s5 = inlined_call_operand.vmem [shape: f32[1,128], index: 5, kind: input, shape index: {}]
  %s6 = inlined_call_operand.vmem [shape: f32[128,128], index: 6, kind: input, shape index: {}]
  %s7 = inlined_call_operand.vmem [shape: f32[1,128], index: 7, kind: input, shape index: {}]
  %s8 = inlined_call_operand.vmem [shape: f32[128,128], index: 8, kind: input, shape index: {}]
  %s9 = inlined_call_operand.vmem [shape: f32[1,128], index: 9, kind: input, shape index: {}]
  %s10 = inlined_call_operand.hbm [shape: f32[64,128], index: 10, kind: output, shape index: {}]
  %s11 = sld [smem:[#allocation0]]
  $region81: #{tpu_custom_call.1} parent=0
    _
  %s13 = ssub.s32 1, %s11
  %s14 = scalar_select 0, %s13, %s11
  $region1: #{tpu_custom_call.1} parent=0
    #allocation3 [shape = 'u8[32768]{0}', space=vmem, size = 0x8000, scoped, tag = 'output window, operand 0']
    #allocation4 [shape = 's32[2]{0}', space=sflag, size = 0x8, scoped, tag = 'scoped memory for tpu_custom_call.1']
    %15 = vsyncpa [#allocation4], 0
    %s16 = scalar_lea.sflag [#allocation4], 1
    %17 = vsyncpa %s16, 0
    loop: start=0, step=1, limit=8
    $region2: #{tpu_custom_call.1} parent=1 // loop_pre_header
      _
    $region3: #{tpu_custom_call.1} parent=1 // loop_header
      %s19 = sphi 0, %s23
      %p20 = scmp.ge.s32.totalorder %s19, 8
      %s26 = sphi 0, %s38
      %s27 = sphi 0, %s34
      %s28 = sphi 0, %s26
      %s29 = sphi 0, %s27
      %s30 = sphi 0, %s28
      %s31 = sphi 0, %s29
      %s41 = sphi 0, %s43
      %s44 = sphi 0, %s41
      %s45 = sphi 0, %s44
      %s61 = sphi 0, %s45
      %s67 = sphi 0, %s69
      %s70 = sphi 0, %s67
      %s71 = sphi 0, %s70
      %s87 = sphi 0, %s71
      %s93 = sphi 0, %s95
      %s96 = sphi 0, %s93
      %s97 = sphi 0, %s96
      %s113 = sphi 0, %s97
      %s117 = sphi 0, %s117
      %s119 = sphi 0, %s117
      %s120 = sphi 0, %s119
      %s134 = sphi 0, %s120
      %s138 = sphi 0, %s138
      %s140 = sphi 0, %s138
      %s141 = sphi 0, %s140
      %s155 = sphi 0, %s141
      %s159 = sphi 0, %s159
      %s161 = sphi 0, %s159
      %s162 = sphi 0, %s161
      %s176 = sphi 0, %s162
      %s180 = sphi 0, %s180
      %s182 = sphi 0, %s180
      %s183 = sphi 0, %s182
      %s197 = sphi 0, %s183
      %s201 = sphi 0, %s201
      %s203 = sphi 0, %s201
      %s204 = sphi 0, %s203
      %s218 = sphi 0, %s204
      %s222 = sphi 0, %s222
      %s224 = sphi 0, %s222
      %s225 = sphi 0, %s224
      %s239 = sphi 0, %s225
      %s243 = sphi 0, %s243
      %s245 = sphi 0, %s243
      %s246 = sphi 0, %s245
      %s260 = sphi 0, %s246
      %s266 = sphi 0, %s268
      %s269 = sphi 0, %s266
      %s270 = sphi 0, %s269
      %s286 = sphi 0, %s270
    $region4: #{tpu_custom_call.1} parent=1 // loop_header_branch
      %22 = sbr.rel (%p20) target = $region8
    $region5: #{tpu_custom_call.1} parent=1 // loop_body
      %s24 = ssub.s32 %s19, 1
      %s25 = ssub.s32 %s19, 2
      %s32 = sadd.s32 1, %s27
      %p33 = scmp.ge.s32.totalorder %s32, 3
      %s34 = scalar_select %p33, 0, %s32
      %s35 = sadd.s32 1, %s26
      %s36 = scalar_select %p33, %s35, %s26
      %p37 = scmp.ge.s32.totalorder %s36, 2
      %s38 = scalar_select %p37, 0, %s36
      %s39 = ssub.s32 %s27, %s34
      %p40 = scmp.eq.s32.totalorder %s39, 0
      %s42 = sadd.s32 %s41, 1
      %s43 = scalar_select %p40, %s41, %s42
      %p46 = pneg %p40
      %p47 = scmp.eq.s32.totalorder %s19, 5
      %p48 = por %p46, %p47
      %p49 = scmp.ne.s32.totalorder %s41, %s44
      %p50 = scmp.eq.s32.totalorder %s19, 0
      %p51 = por %p49, %p50
      %p52 = scmp.ne.s32.totalorder %s41, %s44
      %p53 = scmp.eq.s32.totalorder %s24, 5
      %p54 = por %p52, %p53
      %p55 = scmp.ne.s32.totalorder %s44, %s45
      %p56 = scmp.eq.s32.totalorder %s24, 0
      %p57 = por %p55, %p56
      %p58 = scmp.ne.s32.totalorder %s44, %s45
      %p59 = scmp.eq.s32.totalorder %s25, 5
      %p60 = por %p58, %p59
      %p62 = scmp.ne.s32.totalorder %s45, %s61
      %p63 = scmp.eq.s32.totalorder %s25, 0
      %p64 = por %p62, %p63
      %s65 = ssub.s32 %s27, %s34
      %p66 = scmp.eq.s32.totalorder %s65, 0
      %s68 = sadd.s32 %s67, 1
      %s69 = scalar_select %p66, %s67, %s68
      %p72 = pneg %p66
      %p73 = scmp.eq.s32.totalorder %s19, 5
      %p74 = por %p72, %p73
      %p75 = scmp.ne.s32.totalorder %s67, %s70
      %p76 = scmp.eq.s32.totalorder %s19, 0
      %p77 = por %p75, %p76
      %p78 = scmp.ne.s32.totalorder %s67, %s70
      %p79 = scmp.eq.s32.totalorder %s24, 5
      %p80 = por %p78, %p79
      %p81 = scmp.ne.s32.totalorder %s70, %s71
      %p82 = scmp.eq.s32.totalorder %s24, 0
      %p83 = por %p81, %p82
      %p84 = scmp.ne.s32.totalorder %s70, %s71
      %p85 = scmp.eq.s32.totalorder %s25, 5
      %p86 = por %p84, %p85
      %p88 = scmp.ne.s32.totalorder %s71, %s87
      %p89 = scmp.eq.s32.totalorder %s25, 0
      %p90 = por %p88, %p89
      %s91 = ssub.s32 %s26, %s38
      %p92 = scmp.eq.s32.totalorder %s91, 0
      %s94 = sadd.s32 %s93, 1
      %s95 = scalar_select %p92, %s93, %s94
      %p98 = pneg %p92
      %p99 = scmp.eq.s32.totalorder %s19, 5
      %p100 = por %p98, %p99
      %p101 = scmp.ne.s32.totalorder %s93, %s96
      %p102 = scmp.eq.s32.totalorder %s19, 0
      %p103 = por %p101, %p102
      %p104 = scmp.ne.s32.totalorder %s93, %s96
      %p105 = scmp.eq.s32.totalorder %s24, 5
      %p106 = por %p104, %p105
      %p107 = scmp.ne.s32.totalorder %s96, %s97
      %p108 = scmp.eq.s32.totalorder %s24, 0
      %p109 = por %p107, %p108
      %p110 = scmp.ne.s32.totalorder %s96, %s97
      %p111 = scmp.eq.s32.totalorder %s25, 5
      %p112 = por %p110, %p111
      %p114 = scmp.ne.s32.totalorder %s97, %s113
      %p115 = scmp.eq.s32.totalorder %s25, 0
      %p116 = por %p114, %p115
      %s118 = sadd.s32 %s117, 1
      %p121 = scmp.eq.s32.totalorder %s19, 5
      %p122 = scmp.ne.s32.totalorder %s117, %s119
      %p123 = scmp.eq.s32.totalorder %s19, 0
      %p124 = por %p122, %p123
      %p125 = scmp.ne.s32.totalorder %s117, %s119
      %p126 = scmp.eq.s32.totalorder %s24, 5
      %p127 = por %p125, %p126
      %p128 = scmp.ne.s32.totalorder %s119, %s120
      %p129 = scmp.eq.s32.totalorder %s24, 0
      %p130 = por %p128, %p129
      %p131 = scmp.ne.s32.totalorder %s119, %s120
      %p132 = scmp.eq.s32.totalorder %s25, 5
      %p133 = por %p131, %p132
      %p135 = scmp.ne.s32.totalorder %s120, %s134
      %p136 = scmp.eq.s32.totalorder %s25, 0
      %p137 = por %p135, %p136
      %s139 = sadd.s32 %s138, 1
      %p142 = scmp.eq.s32.totalorder %s19, 5
      %p143 = scmp.ne.s32.totalorder %s138, %s140
      %p144 = scmp.eq.s32.totalorder %s19, 0
      %p145 = por %p143, %p144
      %p146 = scmp.ne.s32.totalorder %s138, %s140
      %p147 = scmp.eq.s32.totalorder %s24, 5
      %p148 = por %p146, %p147
      %p149 = scmp.ne.s32.totalorder %s140, %s141
      %p150 = scmp.eq.s32.totalorder %s24, 0
      %p151 = por %p149, %p150
      %p152 = scmp.ne.s32.totalorder %s140, %s141
      %p153 = scmp.eq.s32.totalorder %s25, 5
      %p154 = por %p152, %p153
      %p156 = scmp.ne.s32.totalorder %s141, %s155
      %p157 = scmp.eq.s32.totalorder %s25, 0
      %p158 = por %p156, %p157
      %s160 = sadd.s32 %s159, 1
      %p163 = scmp.eq.s32.totalorder %s19, 5
      %p164 = scmp.ne.s32.totalorder %s159, %s161
      %p165 = scmp.eq.s32.totalorder %s19, 0
      %p166 = por %p164, %p165
      %p167 = scmp.ne.s32.totalorder %s159, %s161
      %p168 = scmp.eq.s32.totalorder %s24, 5
      %p169 = por %p167, %p168
      %p170 = scmp.ne.s32.totalorder %s161, %s162
      %p171 = scmp.eq.s32.totalorder %s24, 0
      %p172 = por %p170, %p171
      %p173 = scmp.ne.s32.totalorder %s161, %s162
      %p174 = scmp.eq.s32.totalorder %s25, 5
      %p175 = por %p173, %p174
      %p177 = scmp.ne.s32.totalorder %s162, %s176
      %p178 = scmp.eq.s32.totalorder %s25, 0
      %p179 = por %p177, %p178
      %s181 = sadd.s32 %s180, 1
      %p184 = scmp.eq.s32.totalorder %s19, 5
      %p185 = scmp.ne.s32.totalorder %s180, %s182
      %p186 = scmp.eq.s32.totalorder %s19, 0
      %p187 = por %p185, %p186
      %p188 = scmp.ne.s32.totalorder %s180, %s182
      %p189 = scmp.eq.s32.totalorder %s24, 5
      %p190 = por %p188, %p189
      %p191 = scmp.ne.s32.totalorder %s182, %s183
      %p192 = scmp.eq.s32.totalorder %s24, 0
      %p193 = por %p191, %p192
      %p194 = scmp.ne.s32.totalorder %s182, %s183
      %p195 = scmp.eq.s32.totalorder %s25, 5
      %p196 = por %p194, %p195
      %p198 = scmp.ne.s32.totalorder %s183, %s197
      %p199 = scmp.eq.s32.totalorder %s25, 0
      %p200 = por %p198, %p199
      %s202 = sadd.s32 %s201, 1
      %p205 = scmp.eq.s32.totalorder %s19, 5
      %p206 = scmp.ne.s32.totalorder %s201, %s203
      %p207 = scmp.eq.s32.totalorder %s19, 0
      %p208 = por %p206, %p207
      %p209 = scmp.ne.s32.totalorder %s201, %s203
      %p210 = scmp.eq.s32.totalorder %s24, 5
      %p211 = por %p209, %p210
      %p212 = scmp.ne.s32.totalorder %s203, %s204
      %p213 = scmp.eq.s32.totalorder %s24, 0
      %p214 = por %p212, %p213
      %p215 = scmp.ne.s32.totalorder %s203, %s204
      %p216 = scmp.eq.s32.totalorder %s25, 5
      %p217 = por %p215, %p216
      %p219 = scmp.ne.s32.totalorder %s204, %s218
      %p220 = scmp.eq.s32.totalorder %s25, 0
      %p221 = por %p219, %p220
      %s223 = sadd.s32 %s222, 1
      %p226 = scmp.eq.s32.totalorder %s19, 5
      %p227 = scmp.ne.s32.totalorder %s222, %s224
      %p228 = scmp.eq.s32.totalorder %s19, 0
      %p229 = por %p227, %p228
      %p230 = scmp.ne.s32.totalorder %s222, %s224
      %p231 = scmp.eq.s32.totalorder %s24, 5
      %p232 = por %p230, %p231
      %p233 = scmp.ne.s32.totalorder %s224, %s225
      %p234 = scmp.eq.s32.totalorder %s24, 0
      %p235 = por %p233, %p234
      %p236 = scmp.ne.s32.totalorder %s224, %s225
      %p237 = scmp.eq.s32.totalorder %s25, 5
      %p238 = por %p236, %p237
      %p240 = scmp.ne.s32.totalorder %s225, %s239
      %p241 = scmp.eq.s32.totalorder %s25, 0
      %p242 = por %p240, %p241
      %s244 = sadd.s32 %s243, 1
      %p247 = scmp.eq.s32.totalorder %s19, 5
      %p248 = scmp.ne.s32.totalorder %s243, %s245
      %p249 = scmp.eq.s32.totalorder %s19, 0
      %p250 = por %p248, %p249
      %p251 = scmp.ne.s32.totalorder %s243, %s245
      %p252 = scmp.eq.s32.totalorder %s24, 5
      %p253 = por %p251, %p252
      %p254 = scmp.ne.s32.totalorder %s245, %s246
      %p255 = scmp.eq.s32.totalorder %s24, 0
      %p256 = por %p254, %p255
      %p257 = scmp.ne.s32.totalorder %s245, %s246
      %p258 = scmp.eq.s32.totalorder %s25, 5
      %p259 = por %p257, %p258
      %p261 = scmp.ne.s32.totalorder %s246, %s260
      %p262 = scmp.eq.s32.totalorder %s25, 0
      %p263 = por %p261, %p262
      %s264 = ssub.s32 %s26, %s38
      %p265 = scmp.eq.s32.totalorder %s264, 0
      %s267 = sadd.s32 %s266, 1
      %s268 = scalar_select %p265, %s266, %s267
      %p271 = pneg %p265
      %p272 = scmp.eq.s32.totalorder %s19, 5
      %p273 = por %p271, %p272
      %p274 = scmp.ne.s32.totalorder %s266, %s269
      %p275 = scmp.eq.s32.totalorder %s19, 0
      %p276 = por %p274, %p275
      %p277 = scmp.ne.s32.totalorder %s266, %s269
      %p278 = scmp.eq.s32.totalorder %s24, 5
      %p279 = por %p277, %p278
      %p280 = scmp.ne.s32.totalorder %s269, %s270
      %p281 = scmp.eq.s32.totalorder %s24, 0
      %p282 = por %p280, %p281
      %p283 = scmp.ne.s32.totalorder %s269, %s270
      %p284 = scmp.eq.s32.totalorder %s25, 5
      %p285 = por %p283, %p284
      %p287 = scmp.ne.s32.totalorder %s270, %s286
      %p288 = scmp.eq.s32.totalorder %s25, 0
      %p289 = por %p287, %p288
      %p290 = scmp.le.s32.totalorder 1, %s19
      %p291 = scmp.lt.s32.totalorder %s19, 7
      %p292 = pnand %p290, %p291
      %p293 = pneg %p292
      // Predicated region
      $region9: #{tpu_custom_call.1} parent=5 // pred_check
        _
      $region10: #{tpu_custom_call.1} parent=5 // pred_check_branch
        %295 = sbr.rel (%p292) target = $region12
      $region11: #{tpu_custom_call.1} parent=5 // pred_region
        %s296 = ssub.s32 %s19, 1
        // Predicated region
        $region13: #{tpu_custom_call.1} parent=11 // pred_check
          %p297 = pneg %p130
        $region14: #{tpu_custom_call.1} parent=11 // pred_check_branch
          %299 = sbr.rel (%p297) target = $region16
        $region15: #{tpu_custom_call.1} parent=11 // pred_region
          _
        $region16: #{tpu_custom_call.1} parent=11 // pred_fallthru
          _
        // Predicated region
        $region17: #{tpu_custom_call.1} parent=11 // pred_check
          %p300 = pneg %p151
        $region18: #{tpu_custom_call.1} parent=11 // pred_check_branch
          %302 = sbr.rel (%p300) target = $region20
        $region19: #{tpu_custom_call.1} parent=11 // pred_region
          _
        $region20: #{tpu_custom_call.1} parent=11 // pred_fallthru
          _
        // Predicated region
        $region21: #{tpu_custom_call.1} parent=11 // pred_check
          %p303 = pneg %p172
        $region22: #{tpu_custom_call.1} parent=11 // pred_check_branch
          %305 = sbr.rel (%p303) target = $region24
        $region23: #{tpu_custom_call.1} parent=11 // pred_region
          _
        $region24: #{tpu_custom_call.1} parent=11 // pred_fallthru
          _
        // Predicated region
        $region25: #{tpu_custom_call.1} parent=11 // pred_check
          %p306 = pneg %p193
        $region26: #{tpu_custom_call.1} parent=11 // pred_check_branch
          %308 = sbr.rel (%p306) target = $region28
        $region27: #{tpu_custom_call.1} parent=11 // pred_region
          _
        $region28: #{tpu_custom_call.1} parent=11 // pred_fallthru
          _
        // Predicated region
        $region29: #{tpu_custom_call.1} parent=11 // pred_check
          %p309 = pneg %p214
        $region30: #{tpu_custom_call.1} parent=11 // pred_check_branch
          %311 = sbr.rel (%p309) target = $region32
        $region31: #{tpu_custom_call.1} parent=11 // pred_region
          _
        $region32: #{tpu_custom_call.1} parent=11 // pred_fallthru
          _
        // Predicated region
        $region33: #{tpu_custom_call.1} parent=11 // pred_check
          %p312 = pneg %p235
        $region34: #{tpu_custom_call.1} parent=11 // pred_check_branch
          %314 = sbr.rel (%p312) target = $region36
        $region35: #{tpu_custom_call.1} parent=11 // pred_region
          _
        $region36: #{tpu_custom_call.1} parent=11 // pred_fallthru
          _
        // Predicated region
        $region37: #{tpu_custom_call.1} parent=11 // pred_check
          %p315 = pneg %p256
        $region38: #{tpu_custom_call.1} parent=11 // pred_check_branch
          %317 = sbr.rel (%p315) target = $region40
        $region39: #{tpu_custom_call.1} parent=11 // pred_region
          _
        $region40: #{tpu_custom_call.1} parent=11 // pred_fallthru
          _
      $region12: #{tpu_custom_call.1} parent=5 // pred_fallthru
        _
      %p318 = scmp.lt.s32.totalorder %s19, 6
      // Predicated region
      $region41: #{tpu_custom_call.1} parent=5 // pred_check
        %p319 = pneg %p318
      $region42: #{tpu_custom_call.1} parent=5 // pred_check_branch
        %321 = sbr.rel (%p319) target = $region44
      $region43: #{tpu_custom_call.1} parent=5 // pred_region
        // Predicated region
        $region45: #{tpu_custom_call.1} parent=43 // pred_check
          %p322 = pneg %p51
        $region46: #{tpu_custom_call.1} parent=43 // pred_check_branch
          %324 = sbr.rel (%p322) target = $region48
        $region47: #{tpu_custom_call.1} parent=43 // pred_region
          %p325 = scmp.lt.s32.totalorder %s27, 2
          %s326 = scalar_select %p325, %s27, 2
          %s327 = scalar_lea.vmem %s0, %s326
        $region48: #{tpu_custom_call.1} parent=43 // pred_fallthru
          _
        // Predicated region
        $region49: #{tpu_custom_call.1} parent=43 // pred_check
          %p328 = pneg %p77
        $region50: #{tpu_custom_call.1} parent=43 // pred_check_branch
          %330 = sbr.rel (%p328) target = $region52
        $region51: #{tpu_custom_call.1} parent=43 // pred_region
          %s331 = smul.u32 16, %s27
          %p332 = scmp.lt.s32.totalorder %s331, 47
          %s333 = scalar_select %p332, %s331, 47
          %s334 = smul.addr %s333, 8
          %s335 = scalar_lea.vmem %s1, %s334
          %s336 = smul.u32 16, %s27
        $region52: #{tpu_custom_call.1} parent=43 // pred_fallthru
          _
        // Predicated region
        $region53: #{tpu_custom_call.1} parent=43 // pred_check
          %p337 = pneg %p103
        $region54: #{tpu_custom_call.1} parent=43 // pred_check_branch
          %339 = sbr.rel (%p337) target = $region56
        $region55: #{tpu_custom_call.1} parent=43 // pred_region
          %s340 = smul.u32 4, %s26
          %p341 = scmp.lt.s32.totalorder %s340, 7
          %s342 = scalar_select %p341, %s340, 7
          %s343 = smul.addr %s342, 8
          %s344 = scalar_lea.vmem %s2, %s343
          %s345 = smul.u32 4, %s26
        $region56: #{tpu_custom_call.1} parent=43 // pred_fallthru
          _
      $region44: #{tpu_custom_call.1} parent=5 // pred_fallthru
        _
      %p346 = scmp.le.s32.totalorder 1, %s19
      %p347 = scmp.lt.s32.totalorder %s19, 7
      %p348 = pnand %p346, %p347
      %p349 = pneg %p348
      // Predicated region
      $region57: #{tpu_custom_call.1} parent=5 // pred_check
        _
      $region58: #{tpu_custom_call.1} parent=5 // pred_check_branch
        %351 = sbr.rel (%p348) target = $region60
      $region59: #{tpu_custom_call.1} parent=5 // pred_region
        %s352 = ssub.s32 %s19, 1
        %p353 = scmp.lt.s32.totalorder %s29, 2
        %s354 = scalar_select %p353, %s29, 2
        %s355 = scalar_lea.vmem %s0, %s354
        %p356 = pneg %p57
        %p357 = pneg %p54
        %s358 = smul.u32 16, %s29
        %p359 = scmp.lt.s32.totalorder %s358, 47
        %s360 = scalar_select %p359, %s358, 47
        %s361 = smul.addr %s360, 8
        %s362 = scalar_lea.vmem %s1, %s361
        %p363 = pneg %p83
        %p364 = pneg %p80
        %s365 = smul.u32 4, %s28
        %p366 = scmp.lt.s32.totalorder %s365, 7
        %s367 = scalar_select %p366, %s365, 7
        %s368 = smul.addr %s367, 8
        %s369 = scalar_lea.vmem %s2, %s368
        %p370 = pneg %p109
        %p371 = pneg %p106
        %p372 = pneg %p130
        %p373 = pneg %p127
        %p374 = pneg %p151
        %p375 = pneg %p148
        %p376 = pneg %p172
        %p377 = pneg %p169
        %p378 = pneg %p193
        %p379 = pneg %p190
        %p380 = pneg %p214
        %p381 = pneg %p211
        %p382 = pneg %p235
        %p383 = pneg %p232
        %p384 = pneg %p256
        %p385 = pneg %p253
        %p386 = pneg %p282
        %p387 = pneg %p279
        %s388 = sand.u32 %s269, 1
        %s389 = scalar_lea.sflag [#allocation4], %s388
        %s390 = sand.u32 %s269, 1
        %s391 = smul.addr %s390, 32
        %s392 = scalar_lea.vmem [#allocation3], %s391
        %p393 = scmp.lt.s32.totalorder %s29, 2
        %s394 = scalar_select %p393, %s29, 2
        %s395 = scalar_lea.vmem %s0, %s394
        %s396 = smul.u32 16, %s29
        %p397 = scmp.lt.s32.totalorder %s396, 47
        %s398 = scalar_select %p397, %s396, 47
        %s399 = smul.addr %s398, 8
        %s400 = scalar_lea.vmem %s1, %s399
        %s401 = smul.u32 16, %s29
        %s402 = smul.u32 4, %s28
        %p403 = scmp.lt.s32.totalorder %s402, 7
        %s404 = scalar_select %p403, %s402, 7
        %s405 = smul.addr %s404, 8
        %s406 = scalar_lea.vmem %s2, %s405
        %s407 = smul.u32 4, %s28
        %s408 = smul.u32 4, %s28
        %p409 = scmp.eq.s32.totalorder %s29, 0
        // Predicated region
        $region61: #{tpu_custom_call.1} parent=59 // pred_check
          %p410 = pneg %p409
        $region62: #{tpu_custom_call.1} parent=59 // pred_check_branch
          %412 = sbr.rel (%p410) target = $region64
        $region63: #{tpu_custom_call.1} parent=59 // pred_region
          %vm413 = vcmask 64512
          %414 = vst.msk [vmem:[#allocation2] sm:$0xff] %vm413, 0.0
          %415 = vst.msk [vmem:[#allocation2 + $0x8] sm:$0xff] %vm413, 0.0
          %416 = vst.msk [vmem:[#allocation2 + $0x10] sm:$0xff] %vm413, 0.0
          %417 = vst.msk [vmem:[#allocation2 + $0x18] sm:$0xff] %vm413, 0.0
        $region64: #{tpu_custom_call.1} parent=59 // pred_fallthru
          _
        %s418 = smul.u32 %s28, 32
        %v419 = vld [vmem:[%s395] sm:$0x1]
        %v420 = vlaneseq
        %v421 = vshrl.u32 %v420, 7
        %v422 = vadd.s32 %v421, 8
        %v423 = vadd.s32 %v421, 16
        %v424 = vadd.s32 %v421, 24
        %v425 = vstv %s418
        %v426 = vadd.s32 %v425, %v421
        %v427 = vadd.s32 %v425, %v422
        %v428 = vadd.s32 %v425, %v423
        %v429 = vadd.s32 %v425, %v424
        %v430 = vlaneseq
        %v431 = vshrl.u32 %v430, 7
        %v432 = vsub.s32 0, %v431
        %v433 = vrot.slane %v419, %v432
        %vm434 = vcmp.eq.s32.totalorder %v426, %v433
        %vm435 = vcmp.eq.s32.totalorder %v427, %v433
        %vm436 = vcmp.eq.s32.totalorder %v428, %v433
        %vm437 = vcmp.eq.s32.totalorder %v429, %v433
        %v438 = vsel %vm434, 1, 0
        %v439 = vsel %vm435, 1, 0
        %v440 = vsel %vm436, 1, 0
        %v441 = vsel %vm437, 1, 0
        %v442 = vcvt.s32.f32 %v438
        %v443 = vcvt.s32.f32 %v439
        %v444 = vcvt.s32.f32 %v440
        %v445 = vcvt.s32.f32 %v441
        %v446 = vld [vmem:[#allocation2] sm:$0xff]
        %v447 = vld [vmem:[#allocation2 + $0x8] sm:$0xff]
        %v448 = vld [vmem:[#allocation2 + $0x10] sm:$0xff]
        %v449 = vld [vmem:[#allocation2 + $0x18] sm:$0xff]
        %v450 = vld [vmem:[%s400] sm:$0xff]
        %v451 = vld [vmem:[%s400 + $0x8] sm:$0xff]
        %v452 = vld [vmem:[%s400 + $0x10] sm:$0xff]
        %v453 = vld [vmem:[%s400 + $0x18] sm:$0xff]
        %v454 = vld [vmem:[%s400 + $0x20] sm:$0xff]
        %v455 = vld [vmem:[%s400 + $0x28] sm:$0xff]
        %v456 = vld [vmem:[%s400 + $0x30] sm:$0xff]
        %v457 = vld [vmem:[%s400 + $0x38] sm:$0xff]
        %v458 = vld [vmem:[%s400 + $0x40] sm:$0xff]
        %v459 = vld [vmem:[%s400 + $0x48] sm:$0xff]
        %v460 = vld [vmem:[%s400 + $0x50] sm:$0xff]
        %v461 = vld [vmem:[%s400 + $0x58] sm:$0xff]
        %v462 = vld [vmem:[%s400 + $0x60] sm:$0xff]
        %v463 = vld [vmem:[%s400 + $0x68] sm:$0xff]
        %v464 = vld [vmem:[%s400 + $0x70] sm:$0xff]
        %v465 = vld [vmem:[%s400 + $0x78] sm:$0xff]
        %466 = vmatprep.subr.mxu0 0.0
        %467 = vmatpush1.msra.mxu0 %v465
        %468 = vmatprep.subr.mxu0 0.0
        %469 = vmatpush1.msra.mxu0 %v464
        %470 = vmatprep.subr.mxu0 0.0
        %471 = vmatpush1.msra.mxu0 %v463
        %472 = vmatprep.subr.mxu0 0.0
        %473 = vmatpush1.msra.mxu0 %v462
        %474 = vmatprep.subr.mxu0 0.0
        %475 = vmatpush1.msra.mxu0 %v461
        %476 = vmatprep.subr.mxu0 0.0
        %477 = vmatpush1.msra.mxu0 %v460
        %478 = vmatprep.subr.mxu0 0.0
        %479 = vmatpush1.msra.mxu0 %v459
        %480 = vmatprep.subr.mxu0 0.0
        %481 = vmatpush1.msra.mxu0 %v458
        %482 = vmatprep.subr.mxu0 0.0
        %483 = vmatpush1.msra.mxu0 %v457
        %484 = vmatprep.subr.mxu0 0.0
        %485 = vmatpush1.msra.mxu0 %v456
        %486 = vmatprep.subr.mxu0 0.0
        %487 = vmatpush1.msra.mxu0 %v455
        %488 = vmatprep.subr.mxu0 0.0
        %489 = vmatpush1.msra.mxu0 %v454
        %490 = vmatprep.subr.mxu0 0.0
        %491 = vmatpush1.msra.mxu0 %v453
        %492 = vmatprep.subr.mxu0 0.0
        %493 = vmatpush1.msra.mxu0 %v452
        %494 = vmatprep.subr.mxu0 0.0
        %495 = vmatpush1.msra.mxu0 %v451
        %496 = vmatprep.subr.mxu0 0.0
        %497 = vmatpush1.msra.mxu0 %v450
        %498 = vmatprep.subr.mxu0 0.0
        %499 = vmatpush2.msra.mxu0 0.0
        %500 = vmatprep.subr.mxu0 0.0
        %501 = vmatpush2.msra.mxu0 0.0
        %502 = vmatprep.subr.mxu0 0.0
        %503 = vmatpush2.msra.mxu0 0.0
        %504 = vmatprep.subr.mxu0 0.0
        %505 = vmatpush2.msra.mxu0 0.0
        %506 = vmatprep.subr.mxu0 0.0
        %507 = vmatpush2.msra.mxu0 0.0
        %508 = vmatprep.subr.mxu0 0.0
        %509 = vmatpush2.msra.mxu0 0.0
        %510 = vmatprep.subr.mxu0 0.0
        %511 = vmatpush2.msra.mxu0 0.0
        %512 = vmatprep.subr.mxu0 0.0
        %513 = vmatpush2.msra.mxu0 0.0
        %514 = vmatprep.subr.mxu0 0.0
        %515 = vmatpush2.msra.mxu0 0.0
        %516 = vmatprep.subr.mxu0 0.0
        %517 = vmatpush2.msra.mxu0 0.0
        %518 = vmatprep.subr.mxu0 0.0
        %519 = vmatpush2.msra.mxu0 0.0
        %520 = vmatprep.subr.mxu0 0.0
        %521 = vmatpush2.msra.mxu0 0.0
        %522 = vmatprep.subr.mxu0 0.0
        %523 = vmatpush2.msra.mxu0 0.0
        %524 = vmatprep.subr.mxu0 0.0
        %525 = vmatpush2.msra.mxu0 0.0
        %526 = vmatprep.subr.mxu0 0.0
        %527 = vmatpush2.msra.mxu0 0.0
        %528 = vmatprep.subr.mxu0 0.0
        %529 = vmatpush2.msra.mxu0 0.0
        %530 = vmatprep.mubr.f32.mxu0 0.0
        %531 = vmatmul.mubr.f32.gmra.mxu0 %v442
        %v532 = vpop.f32.mrf.mxu0
        %v533 = vadd.f32 0.0, %v532
        %v534 = vpop.f32.mrf.mxu0
        %535 = vmatprep.mubr.f32.mxu0 0.0
        %536 = vmatmul.mubr.f32.gmra.mxu0 %v443
        %v537 = vpop.f32.mrf.mxu0
        %v538 = vadd.f32 0.0, %v537
        %v539 = vpop.f32.mrf.mxu0
        %540 = vmatprep.mubr.f32.mxu0 0.0
        %541 = vmatmul.mubr.f32.gmra.mxu0 %v444
        %v542 = vpop.f32.mrf.mxu0
        %v543 = vadd.f32 0.0, %v542
        %v544 = vpop.f32.mrf.mxu0
        %545 = vmatprep.mubr.f32.mxu0 0.0
        %546 = vmatmul.mubr.f32.gmra.mxu0 %v445
        %v547 = vpop.f32.mrf.mxu0
        %v548 = vadd.f32 0.0, %v547
        %v549 = vpop.f32.mrf.mxu0
        %550 = vdwg.mxu0
        %v551 = vadd.f32 %v446, %v533
        %v552 = vadd.f32 %v447, %v538
        %v553 = vadd.f32 %v448, %v543
        %v554 = vadd.f32 %v449, %v548
        %vm555 = vcmask 64512
        %556 = vst.msk [vmem:[#allocation2] sm:$0xff] %vm555, %v551
        %557 = vst.msk [vmem:[#allocation2 + $0x8] sm:$0xff] %vm555, %v552
        %558 = vst.msk [vmem:[#allocation2 + $0x10] sm:$0xff] %vm555, %v553
        %559 = vst.msk [vmem:[#allocation2 + $0x18] sm:$0xff] %vm555, %v554
        %p560 = scmp.eq.s32.totalorder %s29, 2
        // Predicated region
        $region65: #{tpu_custom_call.1} parent=59 // pred_check
          %p561 = pneg %p560
        $region66: #{tpu_custom_call.1} parent=59 // pred_check_branch
          %563 = sbr.rel (%p561) target = $region68
        $region67: #{tpu_custom_call.1} parent=59 // pred_region
          %v564 = vld [vmem:[%s406] sm:$0xff]
          %v565 = vld [vmem:[%s406 + $0x8] sm:$0xff]
          %v566 = vld [vmem:[%s406 + $0x10] sm:$0xff]
          %v567 = vld [vmem:[%s406 + $0x18] sm:$0xff]
          %v568 = vld [vmem:[%s3] sm:$0xff]
          %v569 = vld [vmem:[%s3 + $0x8] sm:$0xff]
          %v570 = vld [vmem:[#allocation2] sm:$0xff]
          %v571 = vld [vmem:[#allocation2 + $0x8] sm:$0xff]
          %v572 = vld [vmem:[#allocation2 + $0x10] sm:$0xff]
          %v573 = vld [vmem:[#allocation2 + $0x18] sm:$0xff]
          %v574 = vld [vmem:[%s4] sm:$0xff]
          %v576 = vsel %vm555, %v570, 0
          %v579 = vsel %vm555, %v571, 0
          %v582 = vsel %vm555, %v572, 0
          %v585 = vsel %vm555, %v573, 0
          %587 = vmatprep.subr.mxu0 0.0
          %588 = vmatpush1.msra.mxu0 0.0
          %589 = vmatprep.subr.mxu0 0.0
          %590 = vmatpush1.msra.mxu0 0.0
          %591 = vmatprep.subr.mxu0 0.0
          %592 = vmatpush1.msra.mxu0 0.0
          %593 = vmatprep.subr.mxu0 0.0
          %594 = vmatpush1.msra.mxu0 0.0
          %595 = vmatprep.subr.mxu0 0.0
          %596 = vmatpush1.msra.mxu0 0.0
          %597 = vmatprep.subr.mxu0 0.0
          %598 = vmatpush1.msra.mxu0 0.0
          %599 = vmatprep.subr.mxu0 0.0
          %600 = vmatpush1.msra.mxu0 0.0
          %601 = vmatprep.subr.mxu0 0.0
          %602 = vmatpush1.msra.mxu0 0.0
          %603 = vmatprep.subr.mxu0 0.0
          %604 = vmatpush1.msra.mxu0 0.0
          %605 = vmatprep.subr.mxu0 0.0
          %606 = vmatpush1.msra.mxu0 0.0
          %607 = vmatprep.subr.mxu0 0.0
          %608 = vmatpush1.msra.mxu0 0.0
          %609 = vmatprep.subr.mxu0 0.0
          %610 = vmatpush1.msra.mxu0 0.0
          %611 = vmatprep.subr.mxu0 0.0
          %612 = vmatpush1.msra.mxu0 0.0
          %613 = vmatprep.subr.mxu0 0.0
          %614 = vmatpush1.msra.mxu0 0.0
          %615 = vmatprep.subr.mxu0 0.0
          %616 = vmatpush1.msra.mxu0 0.0
          %617 = vmatprep.subr.mxu0 0.0
          %618 = vmatpush1.msra.mxu0 %v574
          %619 = vmatprep.subr.mxu0 0.0
          %620 = vmatpush2.msra.mxu0 0.0
          %621 = vmatprep.subr.mxu0 0.0
          %622 = vmatpush2.msra.mxu0 0.0
          %623 = vmatprep.subr.mxu0 0.0
          %624 = vmatpush2.msra.mxu0 0.0
          %625 = vmatprep.subr.mxu0 0.0
          %626 = vmatpush2.msra.mxu0 0.0
          %627 = vmatprep.subr.mxu0 0.0
          %628 = vmatpush2.msra.mxu0 0.0
          %629 = vmatprep.subr.mxu0 0.0
          %630 = vmatpush2.msra.mxu0 0.0
          %631 = vmatprep.subr.mxu0 0.0
          %632 = vmatpush2.msra.mxu0 0.0
          %633 = vmatprep.subr.mxu0 0.0
          %634 = vmatpush2.msra.mxu0 0.0
          %635 = vmatprep.subr.mxu0 0.0
          %636 = vmatpush2.msra.mxu0 0.0
          %637 = vmatprep.subr.mxu0 0.0
          %638 = vmatpush2.msra.mxu0 0.0
          %639 = vmatprep.subr.mxu0 0.0
          %640 = vmatpush2.msra.mxu0 0.0
          %641 = vmatprep.subr.mxu0 0.0
          %642 = vmatpush2.msra.mxu0 0.0
          %643 = vmatprep.subr.mxu0 0.0
          %644 = vmatpush2.msra.mxu0 0.0
          %645 = vmatprep.subr.mxu0 0.0
          %646 = vmatpush2.msra.mxu0 0.0
          %647 = vmatprep.subr.mxu0 0.0
          %648 = vmatpush2.msra.mxu0 0.0
          %649 = vmatprep.subr.mxu0 0.0
          %650 = vmatpush2.msra.mxu0 0.0
          %651 = vmatprep.mubr.f32.mxu0 0.0
          %652 = vmatmul.mubr.f32.gmra.mxu0 %v576
          %v653 = vpop.f32.mrf.mxu0
          %v654 = vadd.f32 0.0, %v653
          %v655 = vpop.f32.mrf.mxu0
          %656 = vmatprep.mubr.f32.mxu0 0.0
          %657 = vmatmul.mubr.f32.gmra.mxu0 %v579
          %v658 = vpop.f32.mrf.mxu0
          %v659 = vadd.f32 0.0, %v658
          %v660 = vpop.f32.mrf.mxu0
          %661 = vmatprep.mubr.f32.mxu0 0.0
          %662 = vmatmul.mubr.f32.gmra.mxu0 %v582
          %v663 = vpop.f32.mrf.mxu0
          %v664 = vadd.f32 0.0, %v663
          %v665 = vpop.f32.mrf.mxu0
          %666 = vmatprep.mubr.f32.mxu0 0.0
          %667 = vmatmul.mubr.f32.gmra.mxu0 %v585
          %v668 = vpop.f32.mrf.mxu0
          %v669 = vadd.f32 0.0, %v668
          %v670 = vpop.f32.mrf.mxu0
          %671 = vdwg.mxu0
          %vm672 = vcmask 130048
          %v674 = vsel %vm672, %v564, 0
          %v677 = vsel %vm672, %v565, 0
          %v680 = vsel %vm672, %v566, 0
          %v683 = vsel %vm672, %v567, 0
          %685 = vmatprep.subr.mxu0 0.0
          %686 = vmatpush1.msra.mxu0 0.0
          %687 = vmatprep.subr.mxu0 0.0
          %688 = vmatpush1.msra.mxu0 0.0
          %689 = vmatprep.subr.mxu0 0.0
          %690 = vmatpush1.msra.mxu0 0.0
          %691 = vmatprep.subr.mxu0 0.0
          %692 = vmatpush1.msra.mxu0 0.0
          %693 = vmatprep.subr.mxu0 0.0
          %694 = vmatpush1.msra.mxu0 0.0
          %695 = vmatprep.subr.mxu0 0.0
          %696 = vmatpush1.msra.mxu0 0.0
          %697 = vmatprep.subr.mxu0 0.0
          %698 = vmatpush1.msra.mxu0 0.0
          %699 = vmatprep.subr.mxu0 0.0
          %700 = vmatpush1.msra.mxu0 0.0
          %701 = vmatprep.subr.mxu0 0.0
          %702 = vmatpush1.msra.mxu0 0.0
          %703 = vmatprep.subr.mxu0 0.0
          %704 = vmatpush1.msra.mxu0 0.0
          %705 = vmatprep.subr.mxu0 0.0
          %706 = vmatpush1.msra.mxu0 0.0
          %707 = vmatprep.subr.mxu0 0.0
          %708 = vmatpush1.msra.mxu0 0.0
          %709 = vmatprep.subr.mxu0 0.0
          %710 = vmatpush1.msra.mxu0 0.0
          %711 = vmatprep.subr.mxu0 0.0
          %712 = vmatpush1.msra.mxu0 0.0
          %713 = vmatprep.subr.mxu0 0.0
          %714 = vmatpush1.msra.mxu0 %v569
          %715 = vmatprep.subr.mxu0 0.0
          %716 = vmatpush1.msra.mxu0 %v568
          %717 = vmatprep.subr.mxu0 0.0
          %718 = vmatpush2.msra.mxu0 0.0
          %719 = vmatprep.subr.mxu0 0.0
          %720 = vmatpush2.msra.mxu0 0.0
          %721 = vmatprep.subr.mxu0 0.0
          %722 = vmatpush2.msra.mxu0 0.0
          %723 = vmatprep.subr.mxu0 0.0
          %724 = vmatpush2.msra.mxu0 0.0
          %725 = vmatprep.subr.mxu0 0.0
          %726 = vmatpush2.msra.mxu0 0.0
          %727 = vmatprep.subr.mxu0 0.0
          %728 = vmatpush2.msra.mxu0 0.0
          %729 = vmatprep.subr.mxu0 0.0
          %730 = vmatpush2.msra.mxu0 0.0
          %731 = vmatprep.subr.mxu0 0.0
          %732 = vmatpush2.msra.mxu0 0.0
          %733 = vmatprep.subr.mxu0 0.0
          %734 = vmatpush2.msra.mxu0 0.0
          %735 = vmatprep.subr.mxu0 0.0
          %736 = vmatpush2.msra.mxu0 0.0
          %737 = vmatprep.subr.mxu0 0.0
          %738 = vmatpush2.msra.mxu0 0.0
          %739 = vmatprep.subr.mxu0 0.0
          %740 = vmatpush2.msra.mxu0 0.0
          %741 = vmatprep.subr.mxu0 0.0
          %742 = vmatpush2.msra.mxu0 0.0
          %743 = vmatprep.subr.mxu0 0.0
          %744 = vmatpush2.msra.mxu0 0.0
          %745 = vmatprep.subr.mxu0 0.0
          %746 = vmatpush2.msra.mxu0 0.0
          %747 = vmatprep.subr.mxu0 0.0
          %748 = vmatpush2.msra.mxu0 0.0
          %749 = vmatprep.mubr.f32.mxu0 0.0
          %750 = vmatmul.mubr.f32.gmra.mxu0 %v674
          %v751 = vpop.f32.mrf.mxu0
          %v752 = vadd.f32 %v654, %v751
          %v753 = vpop.f32.mrf.mxu0
          %754 = vmatprep.mubr.f32.mxu0 0.0
          %755 = vmatmul.mubr.f32.gmra.mxu0 %v677
          %v756 = vpop.f32.mrf.mxu0
          %v757 = vadd.f32 %v659, %v756
          %v758 = vpop.f32.mrf.mxu0
          %759 = vmatprep.mubr.f32.mxu0 0.0
          %760 = vmatmul.mubr.f32.gmra.mxu0 %v680
          %v761 = vpop.f32.mrf.mxu0
          %v762 = vadd.f32 %v664, %v761
          %v763 = vpop.f32.mrf.mxu0
          %764 = vmatprep.mubr.f32.mxu0 0.0
          %765 = vmatmul.mubr.f32.gmra.mxu0 %v683
          %v766 = vpop.f32.mrf.mxu0
          %v767 = vadd.f32 %v669, %v766
          %v768 = vpop.f32.mrf.mxu0
          %769 = vdwg.mxu0
          %v770 = vld [vmem:[%s5] sm:$0x1]
          %v772 = vlaneseq
          %v773 = vshrl.u32 %v772, 7
          %v774 = vsub.s32 0, %v773
          %v775 = vrot.slane %v770, %v774
          %v777 = vadd.f32 %v752, %v775
          %v778 = vadd.f32 %v757, %v775
          %v779 = vadd.f32 %v762, %v775
          %v780 = vadd.f32 %v767, %v775
          %v781 = vmax.f32 %v777, 0.0
          %v782 = vmax.f32 %v778, 0.0
          %v783 = vmax.f32 %v779, 0.0
          %v784 = vmax.f32 %v780, 0.0
          %v785 = vld [vmem:[%s6] sm:$0xff]
          %v786 = vld [vmem:[%s6 + $0x8] sm:$0xff]
          %v787 = vld [vmem:[%s6 + $0x10] sm:$0xff]
          %v788 = vld [vmem:[%s6 + $0x18] sm:$0xff]
          %v789 = vld [vmem:[%s6 + $0x20] sm:$0xff]
          %v790 = vld [vmem:[%s6 + $0x28] sm:$0xff]
          %v791 = vld [vmem:[%s6 + $0x30] sm:$0xff]
          %v792 = vld [vmem:[%s6 + $0x38] sm:$0xff]
          %v793 = vld [vmem:[%s6 + $0x40] sm:$0xff]
          %v794 = vld [vmem:[%s6 + $0x48] sm:$0xff]
          %v795 = vld [vmem:[%s6 + $0x50] sm:$0xff]
          %v796 = vld [vmem:[%s6 + $0x58] sm:$0xff]
          %v797 = vld [vmem:[%s6 + $0x60] sm:$0xff]
          %v798 = vld [vmem:[%s6 + $0x68] sm:$0xff]
          %v799 = vld [vmem:[%s6 + $0x70] sm:$0xff]
          %v800 = vld [vmem:[%s6 + $0x78] sm:$0xff]
          %v801 = vld [vmem:[%s7] sm:$0x1]
          %v803 = vlaneseq
          %v804 = vshrl.u32 %v803, 7
          %v805 = vsub.s32 0, %v804
          %v806 = vrot.slane %v801, %v805
          %808 = vmatprep.subr.mxu0 0.0
          %809 = vmatpush1.msra.mxu0 %v800
          %810 = vmatprep.subr.mxu0 0.0
          %811 = vmatpush1.msra.mxu0 %v799
          %812 = vmatprep.subr.mxu0 0.0
          %813 = vmatpush1.msra.mxu0 %v798
          %814 = vmatprep.subr.mxu0 0.0
          %815 = vmatpush1.msra.mxu0 %v797
          %816 = vmatprep.subr.mxu0 0.0
          %817 = vmatpush1.msra.mxu0 %v796
          %818 = vmatprep.subr.mxu0 0.0
          %819 = vmatpush1.msra.mxu0 %v795
          %820 = vmatprep.subr.mxu0 0.0
          %821 = vmatpush1.msra.mxu0 %v794
          %822 = vmatprep.subr.mxu0 0.0
          %823 = vmatpush1.msra.mxu0 %v793
          %824 = vmatprep.subr.mxu0 0.0
          %825 = vmatpush1.msra.mxu0 %v792
          %826 = vmatprep.subr.mxu0 0.0
          %827 = vmatpush1.msra.mxu0 %v791
          %828 = vmatprep.subr.mxu0 0.0
          %829 = vmatpush1.msra.mxu0 %v790
          %830 = vmatprep.subr.mxu0 0.0
          %831 = vmatpush1.msra.mxu0 %v789
          %832 = vmatprep.subr.mxu0 0.0
          %833 = vmatpush1.msra.mxu0 %v788
          %834 = vmatprep.subr.mxu0 0.0
          %835 = vmatpush1.msra.mxu0 %v787
          %836 = vmatprep.subr.mxu0 0.0
          %837 = vmatpush1.msra.mxu0 %v786
          %838 = vmatprep.subr.mxu0 0.0
          %839 = vmatpush1.msra.mxu0 %v785
          %840 = vmatprep.subr.mxu0 0.0
          %841 = vmatpush2.msra.mxu0 0.0
          %842 = vmatprep.subr.mxu0 0.0
          %843 = vmatpush2.msra.mxu0 0.0
          %844 = vmatprep.subr.mxu0 0.0
          %845 = vmatpush2.msra.mxu0 0.0
          %846 = vmatprep.subr.mxu0 0.0
          %847 = vmatpush2.msra.mxu0 0.0
          %848 = vmatprep.subr.mxu0 0.0
          %849 = vmatpush2.msra.mxu0 0.0
          %850 = vmatprep.subr.mxu0 0.0
          %851 = vmatpush2.msra.mxu0 0.0
          %852 = vmatprep.subr.mxu0 0.0
          %853 = vmatpush2.msra.mxu0 0.0
          %854 = vmatprep.subr.mxu0 0.0
          %855 = vmatpush2.msra.mxu0 0.0
          %856 = vmatprep.subr.mxu0 0.0
          %857 = vmatpush2.msra.mxu0 0.0
          %858 = vmatprep.subr.mxu0 0.0
          %859 = vmatpush2.msra.mxu0 0.0
          %860 = vmatprep.subr.mxu0 0.0
          %861 = vmatpush2.msra.mxu0 0.0
          %862 = vmatprep.subr.mxu0 0.0
          %863 = vmatpush2.msra.mxu0 0.0
          %864 = vmatprep.subr.mxu0 0.0
          %865 = vmatpush2.msra.mxu0 0.0
          %866 = vmatprep.subr.mxu0 0.0
          %867 = vmatpush2.msra.mxu0 0.0
          %868 = vmatprep.subr.mxu0 0.0
          %869 = vmatpush2.msra.mxu0 0.0
          %870 = vmatprep.subr.mxu0 0.0
          %871 = vmatpush2.msra.mxu0 0.0
          %872 = vmatprep.mubr.f32.mxu0 0.0
          %873 = vmatmul.mubr.f32.gmra.mxu0 %v781
          %v874 = vpop.f32.mrf.mxu0
          %v875 = vadd.f32 %v806, %v874
          %v876 = vpop.f32.mrf.mxu0
          %877 = vmatprep.mubr.f32.mxu0 0.0
          %878 = vmatmul.mubr.f32.gmra.mxu0 %v782
          %v879 = vpop.f32.mrf.mxu0
          %v880 = vadd.f32 %v806, %v879
          %v881 = vpop.f32.mrf.mxu0
          %882 = vmatprep.mubr.f32.mxu0 0.0
          %883 = vmatmul.mubr.f32.gmra.mxu0 %v783
          %v884 = vpop.f32.mrf.mxu0
          %v885 = vadd.f32 %v806, %v884
          %v886 = vpop.f32.mrf.mxu0
          %887 = vmatprep.mubr.f32.mxu0 0.0
          %888 = vmatmul.mubr.f32.gmra.mxu0 %v784
          %v889 = vpop.f32.mrf.mxu0
          %v890 = vadd.f32 %v806, %v889
          %v891 = vpop.f32.mrf.mxu0
          %892 = vdwg.mxu0
          %v893 = vmax.f32 %v875, 0.0
          %v894 = vmax.f32 %v880, 0.0
          %v895 = vmax.f32 %v885, 0.0
          %v896 = vmax.f32 %v890, 0.0
          %v897 = vld [vmem:[%s8] sm:$0xff]
          %v898 = vld [vmem:[%s8 + $0x8] sm:$0xff]
          %v899 = vld [vmem:[%s8 + $0x10] sm:$0xff]
          %v900 = vld [vmem:[%s8 + $0x18] sm:$0xff]
          %v901 = vld [vmem:[%s8 + $0x20] sm:$0xff]
          %v902 = vld [vmem:[%s8 + $0x28] sm:$0xff]
          %v903 = vld [vmem:[%s8 + $0x30] sm:$0xff]
          %v904 = vld [vmem:[%s8 + $0x38] sm:$0xff]
          %v905 = vld [vmem:[%s8 + $0x40] sm:$0xff]
          %v906 = vld [vmem:[%s8 + $0x48] sm:$0xff]
          %v907 = vld [vmem:[%s8 + $0x50] sm:$0xff]
          %v908 = vld [vmem:[%s8 + $0x58] sm:$0xff]
          %v909 = vld [vmem:[%s8 + $0x60] sm:$0xff]
          %v910 = vld [vmem:[%s8 + $0x68] sm:$0xff]
          %v911 = vld [vmem:[%s8 + $0x70] sm:$0xff]
          %v912 = vld [vmem:[%s8 + $0x78] sm:$0xff]
          %v913 = vld [vmem:[%s9] sm:$0x1]
          %v915 = vlaneseq
          %v916 = vshrl.u32 %v915, 7
          %v917 = vsub.s32 0, %v916
          %v918 = vrot.slane %v913, %v917
          %920 = vmatprep.subr.mxu0 0.0
          %921 = vmatpush1.msra.mxu0 %v912
          %922 = vmatprep.subr.mxu0 0.0
          %923 = vmatpush1.msra.mxu0 %v911
          %924 = vmatprep.subr.mxu0 0.0
          %925 = vmatpush1.msra.mxu0 %v910
          %926 = vmatprep.subr.mxu0 0.0
          %927 = vmatpush1.msra.mxu0 %v909
          %928 = vmatprep.subr.mxu0 0.0
          %929 = vmatpush1.msra.mxu0 %v908
          %930 = vmatprep.subr.mxu0 0.0
          %931 = vmatpush1.msra.mxu0 %v907
          %932 = vmatprep.subr.mxu0 0.0
          %933 = vmatpush1.msra.mxu0 %v906
          %934 = vmatprep.subr.mxu0 0.0
          %935 = vmatpush1.msra.mxu0 %v905
          %936 = vmatprep.subr.mxu0 0.0
          %937 = vmatpush1.msra.mxu0 %v904
          %938 = vmatprep.subr.mxu0 0.0
          %939 = vmatpush1.msra.mxu0 %v903
          %940 = vmatprep.subr.mxu0 0.0
          %941 = vmatpush1.msra.mxu0 %v902
          %942 = vmatprep.subr.mxu0 0.0
          %943 = vmatpush1.msra.mxu0 %v901
          %944 = vmatprep.subr.mxu0 0.0
          %945 = vmatpush1.msra.mxu0 %v900
          %946 = vmatprep.subr.mxu0 0.0
          %947 = vmatpush1.msra.mxu0 %v899
          %948 = vmatprep.subr.mxu0 0.0
          %949 = vmatpush1.msra.mxu0 %v898
          %950 = vmatprep.subr.mxu0 0.0
          %951 = vmatpush1.msra.mxu0 %v897
          %952 = vmatprep.subr.mxu0 0.0
          %953 = vmatpush2.msra.mxu0 0.0
          %954 = vmatprep.subr.mxu0 0.0
          %955 = vmatpush2.msra.mxu0 0.0
          %956 = vmatprep.subr.mxu0 0.0
          %957 = vmatpush2.msra.mxu0 0.0
          %958 = vmatprep.subr.mxu0 0.0
          %959 = vmatpush2.msra.mxu0 0.0
          %960 = vmatprep.subr.mxu0 0.0
          %961 = vmatpush2.msra.mxu0 0.0
          %962 = vmatprep.subr.mxu0 0.0
          %963 = vmatpush2.msra.mxu0 0.0
          %964 = vmatprep.subr.mxu0 0.0
          %965 = vmatpush2.msra.mxu0 0.0
          %966 = vmatprep.subr.mxu0 0.0
          %967 = vmatpush2.msra.mxu0 0.0
          %968 = vmatprep.subr.mxu0 0.0
          %969 = vmatpush2.msra.mxu0 0.0
          %970 = vmatprep.subr.mxu0 0.0
          %971 = vmatpush2.msra.mxu0 0.0
          %972 = vmatprep.subr.mxu0 0.0
          %973 = vmatpush2.msra.mxu0 0.0
          %974 = vmatprep.subr.mxu0 0.0
          %975 = vmatpush2.msra.mxu0 0.0
          %976 = vmatprep.subr.mxu0 0.0
          %977 = vmatpush2.msra.mxu0 0.0
          %978 = vmatprep.subr.mxu0 0.0
          %979 = vmatpush2.msra.mxu0 0.0
          %980 = vmatprep.subr.mxu0 0.0
          %981 = vmatpush2.msra.mxu0 0.0
          %982 = vmatprep.subr.mxu0 0.0
          %983 = vmatpush2.msra.mxu0 0.0
          %984 = vmatprep.mubr.f32.mxu0 0.0
          %985 = vmatmul.mubr.f32.gmra.mxu0 %v893
          %v986 = vpop.f32.mrf.mxu0
          %v987 = vadd.f32 %v918, %v986
          %v988 = vpop.f32.mrf.mxu0
          %989 = vmatprep.mubr.f32.mxu0 0.0
          %990 = vmatmul.mubr.f32.gmra.mxu0 %v894
          %v991 = vpop.f32.mrf.mxu0
          %v992 = vadd.f32 %v918, %v991
          %v993 = vpop.f32.mrf.mxu0
          %994 = vmatprep.mubr.f32.mxu0 0.0
          %995 = vmatmul.mubr.f32.gmra.mxu0 %v895
          %v996 = vpop.f32.mrf.mxu0
          %v997 = vadd.f32 %v918, %v996
          %v998 = vpop.f32.mrf.mxu0
          %999 = vmatprep.mubr.f32.mxu0 0.0
          %1000 = vmatmul.mubr.f32.gmra.mxu0 %v896
          %v1001 = vpop.f32.mrf.mxu0
          %v1002 = vadd.f32 %v918, %v1001
          %v1003 = vpop.f32.mrf.mxu0
          %1004 = vdwg.mxu0
          %1005 = vst [vmem:[%s392] sm:$0xff] %v987
          %1006 = vst [vmem:[%s392 + $0x8] sm:$0xff] %v992
          %1007 = vst [vmem:[%s392 + $0x10] sm:$0xff] %v997
          %1008 = vst [vmem:[%s392 + $0x18] sm:$0xff] %v1002
        $region68: #{tpu_custom_call.1} parent=59 // pred_fallthru
          _
        %s1009 = sand.u32 %s269, 1
        %s1010 = scalar_lea.sflag [#allocation4], %s1009
        %s1011 = sand.u32 %s269, 1
        %s1012 = smul.addr %s1011, 32
        %s1013 = scalar_lea.vmem [#allocation3], %s1012
        // Predicated region
        $region69: #{tpu_custom_call.1} parent=59 // pred_check
          %p1014 = pneg %p279
        $region70: #{tpu_custom_call.1} parent=59 // pred_check_branch
          %1016 = sbr.rel (%p1014) target = $region72
        $region71: #{tpu_custom_call.1} parent=59 // pred_region
          %s1017 = smul.u32 4, %s28
          %s1019 = ssub.s32 512, 512
          %1020 = vsyncadd %s1010, %s1019
          %s1021 = smul.addr %s1017, 128
          %s1022 = scalar_lea.hbm %s10, %s1021
          %s1023 = sshll.u32 %s1013, 4
          %s1024 = int_to_ptr.vmem [resolvable:$true] %s1023
          %1029 = dma.vmem_to_hbm [thread:$0]  %s1024, 512, %s1022, %s1010, 128, 128, 8
        $region72: #{tpu_custom_call.1} parent=59 // pred_fallthru
          _
      $region60: #{tpu_custom_call.1} parent=5 // pred_fallthru
        _
      %p1030 = scmp.le.s32.totalorder 2, %s19
      // Predicated region
      $region73: #{tpu_custom_call.1} parent=5 // pred_check
        %p1031 = pneg %p1030
      $region74: #{tpu_custom_call.1} parent=5 // pred_check_branch
        %1033 = sbr.rel (%p1031) target = $region76
      $region75: #{tpu_custom_call.1} parent=5 // pred_region
        %s1034 = ssub.s32 %s19, 2
        // Predicated region
        $region77: #{tpu_custom_call.1} parent=75 // pred_check
          %p1035 = pneg %p285
        $region78: #{tpu_custom_call.1} parent=75 // pred_check_branch
          %1037 = sbr.rel (%p1035) target = $region80
        $region79: #{tpu_custom_call.1} parent=75 // pred_region
          %s1038 = sand.u32 %s270, 1
          %s1039 = scalar_lea.sflag [#allocation4], %s1038
          %s1040 = sand.u32 %s270, 1
          %s1041 = smul.addr %s1040, 32
          %s1042 = scalar_lea.vmem [#allocation3], %s1041
          %1043 = dma.done %s1039, 512
        $region80: #{tpu_custom_call.1} parent=75 // pred_fallthru
          _
      $region76: #{tpu_custom_call.1} parent=5 // pred_fallthru
        _
    $region6: #{tpu_custom_call.1} parent=1 // loop_footer
      %s23 = sadd.s32 1, %s19
    $region7: #{tpu_custom_call.1} parent=1 // loop_footer_branch
      %18 = sbr.rel target = $region3
    $region8: #{tpu_custom_call.1} parent=1 // loop_exit
      _
    %1044 = vsyncpa [#allocation4], 1
    %s1045 = scalar_lea.sflag [#allocation4], 1
    %1046 = vsyncpa %s1045, 1

</llo_original>
